<compile_context>
chip_gen: v7x
topology: tpu7x:2x2x1
jax: 0.10.0
libtpu: 0.0.40
codegen_flags: <defaults>
</compile_context>

<pallas_src>
import functools

import jax
import jax.numpy as jnp
from jax.experimental import pallas as pl
from jax.experimental.pallas import tpu as pltpu

_LANE = 128                               # vreg lane width
_SUBLANE = 8                              # vreg sublane height (32-bit)
_TARGET_BLOCK_BYTES = 4 * 1024 * 1024     # ~4 MiB/block -> 16 MiB live (x4 bufs)
_VMEM_LIMIT_BYTES = 32 * 1024 * 1024      # < v7x 64 MiB phys; fine on v6e/v5e
_MIN_KERNEL_BYTES = _SUBLANE * _LANE * 4  # one full f32 tile; below -> bypass


def _identity_copy_kernel(x_ref, o_ref):
    # Pure pass-through of the current (block_rows, cols) tile; the reshape
    # itself is metadata-only and applied outside the kernel.
    o_ref[...] = x_ref[...]


@functools.lru_cache(maxsize=None)
def _build_copy(rows, cols, block_rows, dtype_name):
    """Cached, jitted identity-copy pallas_call for a (rows, cols) slab."""
    dtype = jnp.dtype(dtype_name)
    copy = pl.pallas_call(
        _identity_copy_kernel,
        out_shape=jax.ShapeDtypeStruct((rows, cols), dtype),
        grid_spec=pltpu.PrefetchScalarGridSpec(
            num_scalar_prefetch=0,
            grid=(pl.cdiv(rows, block_rows),),
            in_specs=[pl.BlockSpec((block_rows, cols), lambda i: (i, 0))],
            out_specs=pl.BlockSpec((block_rows, cols), lambda i: (i, 0)),
        ),
        compiler_params=pltpu.CompilerParams(
            dimension_semantics=("parallel",),
            vmem_limit_bytes=_VMEM_LIMIT_BYTES,
        ),
        cost_estimate=pl.CostEstimate(
            flops=0,
            transcendentals=0,
            bytes_accessed=2 * rows * cols * dtype.itemsize,
        ),
    )
    return jax.jit(copy)


def _pallas_materialize(x, out_shape):
    """Identity copy of `x` through VMEM, returned reshaped to `out_shape`."""
    n = x.size
    dtype = jnp.dtype(x.dtype)
    itemsize = dtype.itemsize

    # Small / lane-unaligned bypass: a tiled copy would need padding passes or
    # a sub-tile launch -> pure overhead.  Fall back to the metadata path.
    if n == 0 or n % _LANE != 0 or n * itemsize < _MIN_KERNEL_BYTES:
        return x.reshape(out_shape)

    # dtype-native packed-sublane multiple: 8 f32, 16 bf16/f16, 32 int8/fp8.
    sub = _SUBLANE * max(1, 4 // itemsize)

    # Lane-dense columns: largest power-of-two multiple of 128 (<= 1024) that
    # divides n while keeping at least `sub` rows (128 always divides n here).
    cols = _LANE
    for c in (1024, 512, 256):
        if n % c == 0 and n // c >= sub:
            cols = c
            break
    rows = n // cols

    if rows <= sub:
        # Single full-extent block (block dim == array dim is always legal).
        block_rows = rows
    else:
        target_rows = max(sub, (_TARGET_BLOCK_BYTES // (cols * itemsize)) // sub * sub)
        half_rows = max(sub, (rows // 2) // sub * sub)   # keep grid >= 2 steps
        block_rows = min(target_rows, half_rows)

    copy = _build_copy(rows, cols, block_rows, dtype.name)
    y2d = copy(x.reshape(rows, cols))      # these reshapes are metadata-only
    return y2d.reshape(out_shape)


def reshape_forward(x, shape, *, materialize=False):
    """Equivalent of Reshape.forward: x.view(x.size(0), *shape)."""
    out_shape = (x.shape[0], *tuple(shape))
    if not materialize:
        # Metadata-only path (preferred): zero HBM traffic; identical
        # contiguous row-major regrouping semantics to torch .view().
        return x.reshape(out_shape)
    # Explicit materialization through the cached Pallas identity-copy kernel.
    return _pallas_materialize(x, out_shape)


if __name__ == "__main__":
    key = jax.random.PRNGKey(0)

    # Module-consistent demo input: batch=2, channels=4, spatial=16x16.
    x = jax.random.normal(key, (2, 4, 16, 16), dtype=jnp.float32)
    target_shape = (16, 64)          # 4*16*16 == 16*64 per batch element

    y_fast = reshape_forward(x, target_shape)                      # metadata path
    y_kernel = reshape_forward(x, target_shape, materialize=True)  # Pallas copy
    jax.block_until_ready(y_kernel)

    y_ref = x.reshape(x.shape[0], *target_shape)
    assert y_fast.shape == (2, 16, 64), y_fast.shape
    assert y_kernel.shape == (2, 16, 64), y_kernel.shape
    assert y_kernel.dtype == x.dtype
    assert bool(jnp.array_equal(y_fast, y_ref))
    assert bool(jnp.array_equal(y_kernel, y_ref))

    # Second case exercising a multi-step grid with a partial (masked) last
    # block: n=15360 -> rows=15, cols=1024, block_rows=8, grid=2.
    x2 = jax.random.normal(jax.random.PRNGKey(0), (2, 3, 40, 64), dtype=jnp.float32)
    y2 = reshape_forward(x2, (120, 64), materialize=True)
    jax.block_until_ready(y2)
    assert y2.shape == (2, 120, 64)
    assert bool(jnp.array_equal(y2, x2.reshape(2, 120, 64)))

    print("KERNEL_OK")
</pallas_src>

<mosaic_0001>
module attributes {stable_mosaic.version = 11 : i64} {
  func.func @_identity_copy_kernel(%arg0: i32, %arg1: memref<8x256xf32, #tpu.memory_space<vmem>>, %arg2: memref<8x256xf32, #tpu.memory_space<vmem>>) attributes {dimension_semantics = [#tpu.dimension_semantics<parallel>], iteration_bounds = array<i64: 1>, scalar_prefetch = 0 : i64, scratch_operands = 0 : i64, tpu.core_type = #tpu.core_type<tc>, window_params = [{transform_indices = @transform_0, window_bounds = array<i64: 8, 256>}, {transform_indices = @transform_1, window_bounds = array<i64: 8, 256>}]} {
    %c0 = arith.constant 0 : index
    %c0_0 = arith.constant 0 : index
    %0 = vector.load %arg1[%c0, %c0_0] : memref<8x256xf32, #tpu.memory_space<vmem>>, vector<8x256xf32>
    %c0_1 = arith.constant 0 : index
    %c0_2 = arith.constant 0 : index
    %1 = vector.load %arg2[%c0_1, %c0_2] : memref<8x256xf32, #tpu.memory_space<vmem>>, vector<8x256xf32>
    tpu.vector_store %arg2[%c0_1, %c0_2], %0 {strides = array<i32>} : memref<8x256xf32, #tpu.memory_space<vmem>>, vector<8x256xf32>,
    return
  }
  func.func @transform_0(%arg0: i32) -> (i32, i32) {
    %c0_i32 = arith.constant 0 : i32
    %c0_i32_0 = arith.constant 0 : i32
    return %arg0, %c0_i32 : i32, i32
  }
  func.func @transform_1(%arg0: i32) -> (i32, i32) {
    %c0_i32 = arith.constant 0 : i32
    %c0_i32_0 = arith.constant 0 : i32
    return %arg0, %c0_i32 : i32, i32
  }
}

</mosaic_0001>

<llo_original>
// kernel: tpu_custom_call.1
$region0: #{tpu_custom_call.1}
  #allocation0 [shape = 'u32[]', space=smem, size = 0x4, offset = 0x4, fixed_abs, tag = 'smem constant byte address 0x4 - core index']
  #allocation1 [shape = 'u32[144,128]{1,0:T(1,128)}', space=vmem, size = 0x12000, scoped, tag = 'internal scratch']
  %s0 = inlined_call_operand.hbm [shape: f32[8,256], index: 0, kind: input, shape index: {}]
  %s1 = inlined_call_operand.hbm [shape: f32[8,256], index: 1, kind: output, shape index: {}]
  %s2 = sld [smem:[#allocation0]]
  $region18: #{tpu_custom_call.1} parent=0
    _
  %s4 = ssub.s32 1, %s2
  %s5 = scalar_select 0, %s4, %s2
  $region1: #{tpu_custom_call.1} parent=0
    #allocation2 [shape = 'u8[8192]{0}', space=vmem, size = 0x2000, scoped, tag = 'input window, operand 0, single buffered']
    #allocation3 [shape = 's32[1]{0}', space=sflag, size = 0x4, scoped, tag = 'scoped memory for tpu_custom_call.1']
    #allocation4 [shape = 's32[1]{0}', space=sflag, size = 0x4, scoped, tag = 'scoped memory for tpu_custom_call.1']
    #allocation5 [shape = 'u8[8192]{0}', space=vmem, size = 0x2000, scoped, tag = 'output window, operand 0, single buffered']
    %6 = vsyncpa [#allocation3], 0
    %7 = vsyncpa [#allocation4], 0
    // Predicated region
    $region2: #{tpu_custom_call.1} parent=1 // pred_check
      _
    $region3: #{tpu_custom_call.1} parent=1 // pred_check_branch
      %9 = sbr.rel (0) target = $region5
    $region4: #{tpu_custom_call.1} parent=1 // pred_region
      %s11 = ssub.s32 256, 256
      %12 = vsyncadd [#allocation3], %s11
      %s14 = sshll.u32 [#allocation2], 4
      %s15 = int_to_ptr.vmem [resolvable:$true] %s14
      %17 = dma.hbm_to_vmem [thread:$0]  %s0, 256, %s15, [#allocation3]
    $region5: #{tpu_custom_call.1} parent=1 // pred_fallthru
      _
    // Predicated region
    $region6: #{tpu_custom_call.1} parent=1 // pred_check
      _
    $region7: #{tpu_custom_call.1} parent=1 // pred_check_branch
      %19 = sbr.rel (0) target = $region9
    $region8: #{tpu_custom_call.1} parent=1 // pred_region
      %20 = dma.done [#allocation3], 256
    $region9: #{tpu_custom_call.1} parent=1 // pred_fallthru
      _
    %v21 = vld [vmem:[#allocation2] sm:$0xff]
    %v22 = vld [vmem:[#allocation2 + $0x8] sm:$0xff]
    %23 = vst [vmem:[#allocation5] sm:$0xff] %v21
    %24 = vst [vmem:[#allocation5 + $0x8] sm:$0xff] %v22
    // Predicated region
    $region10: #{tpu_custom_call.1} parent=1 // pred_check
      _
    $region11: #{tpu_custom_call.1} parent=1 // pred_check_branch
      %26 = sbr.rel (0) target = $region13
    $region12: #{tpu_custom_call.1} parent=1 // pred_region
      %s28 = ssub.s32 256, 256
      %29 = vsyncadd [#allocation4], %s28
      %s31 = sshll.u32 [#allocation5], 4
      %s32 = int_to_ptr.vmem [resolvable:$true] %s31
      %34 = dma.vmem_to_hbm [thread:$0]  %s32, 256, %s1, [#allocation4]
    $region13: #{tpu_custom_call.1} parent=1 // pred_fallthru
      _
    // Predicated region
    $region14: #{tpu_custom_call.1} parent=1 // pred_check
      _
    $region15: #{tpu_custom_call.1} parent=1 // pred_check_branch
      %36 = sbr.rel (0) target = $region17
    $region16: #{tpu_custom_call.1} parent=1 // pred_region
      %37 = dma.done [#allocation4], 256
    $region17: #{tpu_custom_call.1} parent=1 // pred_fallthru
      _
    %38 = vsyncpa [#allocation3], 1
    %39 = vsyncpa [#allocation4], 1

</llo_original>
